<compile_context>
chip_gen: v7x
topology: tpu7x:2x2x1
jax: 0.10.0
libtpu: 0.0.40
codegen_flags: <defaults>
</compile_context>

<pallas_src>
import functools

import jax
import jax.numpy as jnp
from jax.experimental import pallas as pl
from jax.experimental.pallas import tpu as pltpu

HIDDEN = 128
OUT_PAD = 128  # lane-dense padded action dimension
BN_EPS = 1e-5


def dqn_kernel(x_ref, w_ref, b_ref, out_ref, *, in_dim):
    H = HIDDEN
    # Layer 1: cast activations to bf16 in-kernel (MXU-native), f32 accumulate.
    x = x_ref[...].astype(jnp.bfloat16)
    h = jnp.dot(x, w_ref[0:in_dim, :], preferred_element_type=jnp.float32)
    h = jnp.maximum(h + b_ref[0:1, :], 0.0)
    # Dropout(0.2) -> identity in eval mode.
    # TODO(synk): train-mode (batch-statistics BN + RNG dropout via pltpu.prng) not implemented.
    h = jnp.dot(h.astype(jnp.bfloat16), w_ref[in_dim:in_dim + H, :],
                preferred_element_type=jnp.float32)
    h = jnp.maximum(h + b_ref[1:2, :], 0.0)
    h = jnp.dot(h.astype(jnp.bfloat16), w_ref[in_dim + H:in_dim + 2 * H, :],
                preferred_element_type=jnp.float32)
    h = jnp.maximum(h + b_ref[2:3, :], 0.0)
    out = jnp.dot(h.astype(jnp.bfloat16), w_ref[in_dim + 2 * H:in_dim + 3 * H, :],
                  preferred_element_type=jnp.float32) + b_ref[3:4, :]
    out_ref[...] = out.astype(out_ref.dtype)  # bf16 lane-dense store


def _round_up(n, m):
    return ((n + m - 1) // m) * m


def dqn_forward(x, params):
    B, IN = x.shape
    A = params["w4"].shape[1]
    H = HIDDEN

    # --- Fold eval-mode BN (affine with running stats) into the Linear (exact in f32). ---
    def fold(w, b, bn):
        gamma, beta, rmean, rvar = bn[0], bn[1], bn[2], bn[3]
        scale = gamma * jax.lax.rsqrt(rvar + BN_EPS)        # (128,)
        shift = beta - rmean * scale                        # (128,)
        return w * scale[None, :], b * scale[None, :] + shift[None, :]

    w1f, b1f = fold(params["w1"], params["b1"], params["bn1"])
    w2f, b2f = fold(params["w2"], params["b2"], params["bn2"])
    w3f, b3f = fold(params["w3"], params["b3"], params["bn3"])

    # --- Lane-dense final layer: pad action dim with zeros to 128. ---
    w4p = jnp.zeros((H, OUT_PAD), jnp.float32).at[:, :A].set(params["w4"])
    b4p = jnp.zeros((1, OUT_PAD), jnp.float32).at[:, :A].set(params["b4"])

    # --- Sublane-align the input feature dim (zero-pad x cols + w1 rows: exact). ---
    IN_P = _round_up(IN, 8)
    x_in = x
    if IN_P != IN:
        x_in = jnp.pad(x, ((0, 0), (0, IN_P - IN)))
        w1f = jnp.pad(w1f, ((0, IN_P - IN), (0, 0)))

    # --- Pack params: one bf16 weight slab (w1|w2|w3|w4 rows), stacked f32 biases. ---
    w_packed = jnp.concatenate([w1f, w2f, w3f, w4p], axis=0).astype(jnp.bfloat16)
    b_packed = jnp.concatenate([b1f, b2f, b3f, b4p], axis=0)       # (4, 128) f32

    # --- Batch tiling: single tile for tiny batches, >=2 tiles (v7x 2 TCs) capped at 1024. ---
    B8 = _round_up(B, 8)
    if B8 <= 256:
        TB = B8
    else:
        TB = min(1024, _round_up(pl.cdiv(B8, 2), 8))
    B_pad = _round_up(B8, TB)
    if B_pad != B:
        x_in = jnp.zeros((B_pad, IN_P), x_in.dtype).at[:B, :].set(x_in)

    grid = (B_pad // TB,)
    flops = 2 * B_pad * (IN_P * H + 2 * H * H + H * OUT_PAD)
    bytes_accessed = (x_in.size * 4 + w_packed.size * 2 + b_packed.size * 4
                      + B_pad * OUT_PAD * 2)

    kernel = functools.partial(dqn_kernel, in_dim=IN_P)
    out = pl.pallas_call(
        kernel,
        grid=grid,
        out_shape=jax.ShapeDtypeStruct((B_pad, OUT_PAD), jnp.bfloat16),
        in_specs=[
            # activations: tiled over batch, f32 read (cast in-kernel)
            pl.BlockSpec((TB, IN_P), lambda i: (i, 0)),
            # grid-invariant weight slab / biases: single-buffered, VMEM-resident
            pl.BlockSpec((IN_P + 3 * H, H), lambda i: (0, 0),
                         pipeline_mode=pl.Buffered(1)),
            pl.BlockSpec((4, OUT_PAD), lambda i: (0, 0),
                         pipeline_mode=pl.Buffered(1)),
        ],
        out_specs=pl.BlockSpec((TB, OUT_PAD), lambda i: (i, 0)),
        compiler_params=pltpu.CompilerParams(
            dimension_semantics=("parallel",)),
        cost_estimate=pl.CostEstimate(
            flops=flops, transcendentals=0, bytes_accessed=bytes_accessed),
    )(x_in, w_packed, b_packed)

    return out[:B, :A]


def init_params(key, input_size, action_size):
    ks = jax.random.split(key, 16)
    p = {}
    dims = [(input_size, HIDDEN), (HIDDEN, HIDDEN), (HIDDEN, HIDDEN), (HIDDEN, action_size)]
    for li, (din, dout) in enumerate(dims, start=1):
        p[f"w{li}"] = 0.05 * jax.random.normal(ks[2 * li], (din, dout), jnp.float32)
        p[f"b{li}"] = 0.05 * jax.random.normal(ks[2 * li + 1], (1, dout), jnp.float32)
    # bn params packed as rows: [gamma, beta, running_mean, running_var]
    for li in range(1, 4):
        gk, bk, mk, vk = jax.random.split(ks[8 + li], 4)
        gamma = 1.0 + 0.1 * jax.random.normal(gk, (1, HIDDEN), jnp.float32)
        beta = 0.1 * jax.random.normal(bk, (1, HIDDEN), jnp.float32)
        rmean = 0.1 * jax.random.normal(mk, (1, HIDDEN), jnp.float32)
        rvar = 0.5 + jax.random.uniform(vk, (1, HIDDEN), jnp.float32)
        p[f"bn{li}"] = jnp.concatenate([gamma, beta, rmean, rvar], axis=0)
    return p


def reference_forward(x, p):
    def bn_relu(h, bn):
        gamma, beta, rmean, rvar = bn[0:1], bn[1:2], bn[2:3], bn[3:4]
        return jnp.maximum(gamma * (h - rmean) / jnp.sqrt(rvar + BN_EPS) + beta, 0.0)

    h = bn_relu(x @ p["w1"] + p["b1"], p["bn1"])
    h = bn_relu(h @ p["w2"] + p["b2"], p["bn2"])
    h = bn_relu(h @ p["w3"] + p["b3"], p["bn3"])
    return h @ p["w4"] + p["b4"]


if __name__ == "__main__":
    key = jax.random.PRNGKey(0)
    kx, kp = jax.random.split(key)

    batch, input_size, action_size = 8, 32, 8
    x = jax.random.normal(kx, (batch, input_size), jnp.float32)
    params = init_params(kp, input_size, action_size)

    out = dqn_forward(x, params)
    out = jax.block_until_ready(out)

    ref = reference_forward(x, params)
    assert out.shape == (batch, action_size)
    # bf16 matmul operands + bf16 output (f32 accumulation) -> loosened tolerance.
    assert jnp.allclose(out.astype(jnp.float32), ref, atol=2e-2, rtol=2e-2), "mismatch vs reference"
    print("KERNEL_OK")
</pallas_src>

<mosaic_0001>
module attributes {stable_mosaic.version = 11 : i64} {
  func.func @dqn_kernel(%arg0: i32, %arg1: memref<8x32xf32, #tpu.memory_space<vmem>>, %arg2: memref<416x128xbf16, #tpu.memory_space<vmem>>, %arg3: memref<4x128xf32, #tpu.memory_space<vmem>>, %arg4: memref<8x128xbf16, #tpu.memory_space<vmem>>) attributes {dimension_semantics = [#tpu.dimension_semantics<parallel>], iteration_bounds = array<i64: 1>, scalar_prefetch = 0 : i64, scratch_operands = 0 : i64, tpu.core_type = #tpu.core_type<tc>, window_params = [{transform_indices = @transform_0, window_bounds = array<i64: 8, 32>}, {pipeline_mode = #tpu.pipeline_mode<synchronous>, transform_indices = @transform_1, window_bounds = array<i64: 416, 128>}, {pipeline_mode = #tpu.pipeline_mode<synchronous>, transform_indices = @transform_2, window_bounds = array<i64: 4, 128>}, {transform_indices = @transform_3, window_bounds = array<i64: 8, 128>}]} {
    %c0 = arith.constant 0 : index
    %c0_0 = arith.constant 0 : index
    %0 = vector.load %arg1[%c0, %c0_0] : memref<8x32xf32, #tpu.memory_space<vmem>>, vector<8x32xf32>
    %1 = arith.truncf %0 : vector<8x32xf32> to vector<8x32xbf16>
    %c0_1 = arith.constant 0 : index
    %c0_2 = arith.constant 0 : index
    %2 = vector.load %arg2[%c0_1, %c0_2] : memref<416x128xbf16, #tpu.memory_space<vmem>>, vector<32x128xbf16>
    %cst = arith.constant dense<0.000000e+00> : vector<8x128xf32>
    %3 = tpu.matmul %1, %2, %cst {dimension_numbers = #tpu.dot_dimension_numbers<[1], [0], [0], [1], [0, 0, 1, 1], [], []>} : vector<8x32xbf16>, vector<32x128xbf16>, vector<8x128xf32> -> vector<8x128xf32>
    %c0_3 = arith.constant 0 : index
    %c0_4 = arith.constant 0 : index
    %4 = vector.load %arg3[%c0_3, %c0_4] : memref<4x128xf32, #tpu.memory_space<vmem>>, vector<1x128xf32>
    %5 = vector.broadcast %4 : vector<1x128xf32> to vector<8x128xf32>
    %6 = arith.addf %3, %5 : vector<8x128xf32>
    %cst_5 = arith.constant 0.000000e+00 : f32
    %7 = vector.broadcast %cst_5 : f32 to vector<8x128xf32>
    %8 = arith.maximumf %6, %7 : vector<8x128xf32>
    %9 = arith.truncf %8 : vector<8x128xf32> to vector<8x128xbf16>
    %c32 = arith.constant 32 : index
    %c0_6 = arith.constant 0 : index
    %10 = vector.load %arg2[%c32, %c0_6] : memref<416x128xbf16, #tpu.memory_space<vmem>>, vector<128x128xbf16>
    %cst_7 = arith.constant dense<0.000000e+00> : vector<8x128xf32>
    %11 = tpu.matmul %9, %10, %cst_7 {dimension_numbers = #tpu.dot_dimension_numbers<[1], [0], [0], [1], [0, 0, 1, 1], [], []>} : vector<8x128xbf16>, vector<128x128xbf16>, vector<8x128xf32> -> vector<8x128xf32>
    %c1 = arith.constant 1 : index
    %c0_8 = arith.constant 0 : index
    %12 = vector.load %arg3[%c1, %c0_8] : memref<4x128xf32, #tpu.memory_space<vmem>>, vector<1x128xf32>
    %13 = vector.broadcast %12 : vector<1x128xf32> to vector<8x128xf32>
    %14 = arith.addf %11, %13 : vector<8x128xf32>
    %cst_9 = arith.constant 0.000000e+00 : f32
    %15 = vector.broadcast %cst_9 : f32 to vector<8x128xf32>
    %16 = arith.maximumf %14, %15 : vector<8x128xf32>
    %17 = arith.truncf %16 : vector<8x128xf32> to vector<8x128xbf16>
    %c160 = arith.constant 160 : index
    %c0_10 = arith.constant 0 : index
    %18 = vector.load %arg2[%c160, %c0_10] : memref<416x128xbf16, #tpu.memory_space<vmem>>, vector<128x128xbf16>
    %cst_11 = arith.constant dense<0.000000e+00> : vector<8x128xf32>
    %19 = tpu.matmul %17, %18, %cst_11 {dimension_numbers = #tpu.dot_dimension_numbers<[1], [0], [0], [1], [0, 0, 1, 1], [], []>} : vector<8x128xbf16>, vector<128x128xbf16>, vector<8x128xf32> -> vector<8x128xf32>
    %c2 = arith.constant 2 : index
    %c0_12 = arith.constant 0 : index
    %20 = vector.load %arg3[%c2, %c0_12] : memref<4x128xf32, #tpu.memory_space<vmem>>, vector<1x128xf32>
    %21 = vector.broadcast %20 : vector<1x128xf32> to vector<8x128xf32>
    %22 = arith.addf %19, %21 : vector<8x128xf32>
    %cst_13 = arith.constant 0.000000e+00 : f32
    %23 = vector.broadcast %cst_13 : f32 to vector<8x128xf32>
    %24 = arith.maximumf %22, %23 : vector<8x128xf32>
    %25 = arith.truncf %24 : vector<8x128xf32> to vector<8x128xbf16>
    %c288 = arith.constant 288 : index
    %c0_14 = arith.constant 0 : index
    %26 = vector.load %arg2[%c288, %c0_14] : memref<416x128xbf16, #tpu.memory_space<vmem>>, vector<128x128xbf16>
    %cst_15 = arith.constant dense<0.000000e+00> : vector<8x128xf32>
    %27 = tpu.matmul %25, %26, %cst_15 {dimension_numbers = #tpu.dot_dimension_numbers<[1], [0], [0], [1], [0, 0, 1, 1], [], []>} : vector<8x128xbf16>, vector<128x128xbf16>, vector<8x128xf32> -> vector<8x128xf32>
    %c3 = arith.constant 3 : index
    %c0_16 = arith.constant 0 : index
    %28 = vector.load %arg3[%c3, %c0_16] : memref<4x128xf32, #tpu.memory_space<vmem>>, vector<1x128xf32>
    %29 = vector.broadcast %28 : vector<1x128xf32> to vector<8x128xf32>
    %30 = arith.addf %27, %29 : vector<8x128xf32>
    %31 = arith.truncf %30 : vector<8x128xf32> to vector<8x128xbf16>
    %c0_17 = arith.constant 0 : index
    %c0_18 = arith.constant 0 : index
    %32 = vector.load %arg4[%c0_17, %c0_18] : memref<8x128xbf16, #tpu.memory_space<vmem>>, vector<8x128xbf16>
    tpu.vector_store %arg4[%c0_17, %c0_18], %31 {strides = array<i32>} : memref<8x128xbf16, #tpu.memory_space<vmem>>, vector<8x128xbf16>,
    return
  }
  func.func @transform_0(%arg0: i32) -> (i32, i32) {
    %c0_i32 = arith.constant 0 : i32
    %c0_i32_0 = arith.constant 0 : i32
    return %arg0, %c0_i32 : i32, i32
  }
  func.func @transform_1(%arg0: i32) -> (i32, i32) {
    %c0_i32 = arith.constant 0 : i32
    %c0_i32_0 = arith.constant 0 : i32
    %c0_i32_1 = arith.constant 0 : i32
    return %c0_i32, %c0_i32_0 : i32, i32
  }
  func.func @transform_2(%arg0: i32) -> (i32, i32) {
    %c0_i32 = arith.constant 0 : i32
    %c0_i32_0 = arith.constant 0 : i32
    %c0_i32_1 = arith.constant 0 : i32
    return %c0_i32, %c0_i32_0 : i32, i32
  }
  func.func @transform_3(%arg0: i32) -> (i32, i32) {
    %c0_i32 = arith.constant 0 : i32
    %c0_i32_0 = arith.constant 0 : i32
    return %arg0, %c0_i32 : i32, i32
  }
}

</mosaic_0001>

<llo_original>
// kernel: tpu_custom_call.1
$region0: #{tpu_custom_call.1}
  #allocation0 [shape = 'u32[]', space=smem, size = 0x4, offset = 0x4, fixed_abs, tag = 'smem constant byte address 0x4 - core index']
  #allocation1 [shape = 'u32[144,128]{1,0:T(1,128)}', space=vmem, size = 0x12000, scoped, tag = 'internal scratch']
  %s0 = inlined_call_operand.hbm [shape: f32[8,32], index: 0, kind: input, shape index: {}]
  %s1 = inlined_call_operand.hbm [shape: bf16[416,128], index: 1, kind: input, shape index: {}]
  %s2 = inlined_call_operand.vmem [shape: f32[4,128], index: 2, kind: input, shape index: {}]
  %s3 = inlined_call_operand.hbm [shape: bf16[8,128], index: 3, kind: output, shape index: {}]
  %s4 = sld [smem:[#allocation0]]
  $region30: #{tpu_custom_call.1} parent=0
    _
  %s6 = ssub.s32 1, %s4
  %s7 = scalar_select 0, %s6, %s4
  $region1: #{tpu_custom_call.1} parent=0
    #allocation2 [shape = 'u8[4096]{0}', space=vmem, size = 0x1000, scoped, tag = 'input window, operand 0, single buffered']
    #allocation3 [shape = 's32[1]{0}', space=sflag, size = 0x4, scoped, tag = 'scoped memory for tpu_custom_call.1']
    #allocation4 [shape = 's32[1]{0}', space=sflag, size = 0x4, scoped, tag = 'scoped memory for tpu_custom_call.1']
    #allocation5 [shape = 'u8[106496]{0}', space=vmem, size = 0x1a000, scoped, tag = 'input window, operand 1, single buffered']
    #allocation6 [shape = 's32[1]{0}', space=sflag, size = 0x4, scoped, tag = 'scoped memory for tpu_custom_call.1']
    #allocation7 [shape = 'u8[2048]{0}', space=vmem, size = 0x800, scoped, tag = 'output window, operand 0, single buffered']
    %8 = vsyncpa [#allocation3], 0
    %9 = vsyncpa [#allocation6], 0
    %10 = vsyncpa [#allocation4], 0
    // Predicated region
    $region2: #{tpu_custom_call.1} parent=1 // pred_check
      _
    $region3: #{tpu_custom_call.1} parent=1 // pred_check_branch
      %12 = sbr.rel (0) target = $region5
    $region4: #{tpu_custom_call.1} parent=1 // pred_region
      %s14 = ssub.s32 128, 128
      %15 = vsyncadd [#allocation3], %s14
      %s17 = sshll.u32 [#allocation2], 4
      %s18 = int_to_ptr.vmem [resolvable:$true] %s17
      %20 = dma.hbm_to_vmem [thread:$0]  %s0, 128, %s18, [#allocation3]
    $region5: #{tpu_custom_call.1} parent=1 // pred_fallthru
      _
    // Predicated region
    $region6: #{tpu_custom_call.1} parent=1 // pred_check
      _
    $region7: #{tpu_custom_call.1} parent=1 // pred_check_branch
      %22 = sbr.rel (0) target = $region9
    $region8: #{tpu_custom_call.1} parent=1 // pred_region
      %s24 = ssub.s32 3328, 3328
      %25 = vsyncadd [#allocation6], %s24
      %s26 = sshll.u32 [#allocation5], 4
      %s27 = int_to_ptr.vmem [resolvable:$true] %s26
      %32 = dma.hbm_to_vmem [thread:$0]  %s1, 3328, %s27, [#allocation6], 64, 64, 4
    $region9: #{tpu_custom_call.1} parent=1 // pred_fallthru
      _
    // Predicated region
    $region10: #{tpu_custom_call.1} parent=1 // pred_check
      _
    $region11: #{tpu_custom_call.1} parent=1 // pred_check_branch
      %34 = sbr.rel (0) target = $region13
    $region12: #{tpu_custom_call.1} parent=1 // pred_region
      _
    $region13: #{tpu_custom_call.1} parent=1 // pred_fallthru
      _
    // Predicated region
    $region14: #{tpu_custom_call.1} parent=1 // pred_check
      _
    $region15: #{tpu_custom_call.1} parent=1 // pred_check_branch
      %36 = sbr.rel (0) target = $region17
    $region16: #{tpu_custom_call.1} parent=1 // pred_region
      %37 = dma.done [#allocation3], 128
    $region17: #{tpu_custom_call.1} parent=1 // pred_fallthru
      _
    // Predicated region
    $region18: #{tpu_custom_call.1} parent=1 // pred_check
      _
    $region19: #{tpu_custom_call.1} parent=1 // pred_check_branch
      %39 = sbr.rel (0) target = $region21
    $region20: #{tpu_custom_call.1} parent=1 // pred_region
      %40 = dma.done [#allocation6], 3328
    $region21: #{tpu_custom_call.1} parent=1 // pred_fallthru
      _
    %v42 = vld [vmem:[#allocation2] sm:$0xff]
    %v43 = vpack.c.bf16 %v42, %v42
    %v44 = vld [vmem:[#allocation5] sm:$0xf]
    %v45 = vld [vmem:[#allocation5 + $0x4] sm:$0xf]
    %v46 = vld [vmem:[#allocation5 + $0x8] sm:$0xf]
    %v47 = vld [vmem:[#allocation5 + $0xc] sm:$0xf]
    %v48 = vld [vmem:[%s2] sm:$0x1]
    %v49 = vlaneseq
    %v50 = vshrl.u32 %v49, 7
    %v51 = vsub.s32 0, %v50
    %v52 = vrot.slane %v48, %v51
    %v57 = vunpack.c.l.b16 %v44
    %v58 = vunpack.c.l.b16 %v45
    %v59 = vunpack.c.l.b16 %v46
    %v60 = vunpack.c.l.b16 %v47
    %v61 = vpack.c.b16 %v58, %v57
    %v62 = vpack.c.b16 %v60, %v59
    %vm65 = vcmask 261120
    %v67 = vsel %vm65, %v43, 0
    %69 = vmatprep.subr.bf16.mxu0 0
    %70 = vmatpush1.bf16.msra.mxu0 %v61
    %71 = vmatprep.subr.bf16.mxu0 0
    %72 = vmatpush1.bf16.msra.mxu0 %v62
    %73 = vmatprep.subr.bf16.mxu0 0
    %74 = vmatpush1.bf16.msra.mxu0 0
    %75 = vmatprep.subr.bf16.mxu0 0
    %76 = vmatpush1.bf16.msra.mxu0 0
    %77 = vmatprep.subr.bf16.mxu0 0
    %78 = vmatpush1.bf16.msra.mxu0 0
    %79 = vmatprep.subr.bf16.mxu0 0
    %80 = vmatpush1.bf16.msra.mxu0 0
    %81 = vmatprep.subr.bf16.mxu0 0
    %82 = vmatpush1.bf16.msra.mxu0 0
    %83 = vmatprep.subr.bf16.mxu0 0
    %84 = vmatpush1.bf16.msra.mxu0 0
    %85 = vmatprep.subr.bf16.mxu0 0
    %86 = vmatpush1.bf16.msra.mxu0 0
    %87 = vmatprep.subr.bf16.mxu0 0
    %88 = vmatpush1.bf16.msra.mxu0 0
    %89 = vmatprep.subr.bf16.mxu0 0
    %90 = vmatpush1.bf16.msra.mxu0 0
    %91 = vmatprep.subr.bf16.mxu0 0
    %92 = vmatpush1.bf16.msra.mxu0 0
    %93 = vmatprep.subr.bf16.mxu0 0
    %94 = vmatpush1.bf16.msra.mxu0 0
    %95 = vmatprep.subr.bf16.mxu0 0
    %96 = vmatpush1.bf16.msra.mxu0 0
    %97 = vmatprep.subr.bf16.mxu0 0
    %98 = vmatpush1.bf16.msra.mxu0 0
    %99 = vmatprep.subr.bf16.mxu0 0
    %100 = vmatpush1.bf16.msra.mxu0 0
    %101 = vmatprep.mubr.bf16.mxu0 0
    %102 = vmatmul.mubr.bf16.gmra.mrb[0].mxu0 %v67
    %v103 = vpop.f32.mrb[0].mxu0
    %v104 = vadd.f32 %v52, %v103
    %v105 = vpop.f32.mrb[0].mxu0
    %v106 = vpop.f32.mrb[0].mxu0
    %v107 = vpop.f32.mrb[0].mxu0
    %108 = vdwg.mxu0
    %v109 = vmax.f32 %v104, 0.0
    %v110 = vpack.c.bf16 %v109, %v109
    %v111 = vld [vmem:[#allocation5 + $0x10] sm:$0xf]
    %v112 = vld [vmem:[#allocation5 + $0x14] sm:$0xf]
    %v113 = vld [vmem:[#allocation5 + $0x18] sm:$0xf]
    %v114 = vld [vmem:[#allocation5 + $0x1c] sm:$0xf]
    %v115 = vld [vmem:[#allocation5 + $0x20] sm:$0xf]
    %v116 = vld [vmem:[#allocation5 + $0x24] sm:$0xf]
    %v117 = vld [vmem:[#allocation5 + $0x28] sm:$0xf]
    %v118 = vld [vmem:[#allocation5 + $0x2c] sm:$0xf]
    %v119 = vld [vmem:[#allocation5 + $0x30] sm:$0xf]
    %v120 = vld [vmem:[#allocation5 + $0x34] sm:$0xf]
    %v121 = vld [vmem:[#allocation5 + $0x38] sm:$0xf]
    %v122 = vld [vmem:[#allocation5 + $0x3c] sm:$0xf]
    %v123 = vld [vmem:[#allocation5 + $0x40] sm:$0xf]
    %v124 = vld [vmem:[#allocation5 + $0x44] sm:$0xf]
    %v125 = vld [vmem:[#allocation5 + $0x48] sm:$0xf]
    %v126 = vld [vmem:[#allocation5 + $0x4c] sm:$0xf]
    %v127 = vld [vmem:[%s2 + $0x1] sm:$0x1]
    %v128 = vlaneseq
    %v129 = vshrl.u32 %v128, 7
    %v130 = vsub.s32 0, %v129
    %v131 = vrot.slane %v127, %v130
    %v148 = vunpack.c.l.b16 %v111
    %v149 = vunpack.c.l.b16 %v112
    %v150 = vunpack.c.l.b16 %v113
    %v151 = vunpack.c.l.b16 %v114
    %v152 = vunpack.c.l.b16 %v115
    %v153 = vunpack.c.l.b16 %v116
    %v154 = vunpack.c.l.b16 %v117
    %v155 = vunpack.c.l.b16 %v118
    %v156 = vunpack.c.l.b16 %v119
    %v157 = vunpack.c.l.b16 %v120
    %v158 = vunpack.c.l.b16 %v121
    %v159 = vunpack.c.l.b16 %v122
    %v160 = vunpack.c.l.b16 %v123
    %v161 = vunpack.c.l.b16 %v124
    %v162 = vunpack.c.l.b16 %v125
    %v163 = vunpack.c.l.b16 %v126
    %v164 = vpack.c.b16 %v149, %v148
    %v165 = vpack.c.b16 %v151, %v150
    %v166 = vpack.c.b16 %v153, %v152
    %v167 = vpack.c.b16 %v155, %v154
    %v168 = vpack.c.b16 %v157, %v156
    %v169 = vpack.c.b16 %v159, %v158
    %v170 = vpack.c.b16 %v161, %v160
    %v171 = vpack.c.b16 %v163, %v162
    %180 = vmatprep.subr.bf16.mxu0 0
    %181 = vmatpush1.bf16.msra.mxu0 %v164
    %182 = vmatprep.subr.bf16.mxu0 0
    %183 = vmatpush1.bf16.msra.mxu0 %v165
    %184 = vmatprep.subr.bf16.mxu0 0
    %185 = vmatpush1.bf16.msra.mxu0 %v166
    %186 = vmatprep.subr.bf16.mxu0 0
    %187 = vmatpush1.bf16.msra.mxu0 %v167
    %188 = vmatprep.subr.bf16.mxu0 0
    %189 = vmatpush1.bf16.msra.mxu0 %v168
    %190 = vmatprep.subr.bf16.mxu0 0
    %191 = vmatpush1.bf16.msra.mxu0 %v169
    %192 = vmatprep.subr.bf16.mxu0 0
    %193 = vmatpush1.bf16.msra.mxu0 %v170
    %194 = vmatprep.subr.bf16.mxu0 0
    %195 = vmatpush1.bf16.msra.mxu0 %v171
    %196 = vmatprep.subr.bf16.mxu0 0
    %197 = vmatpush1.bf16.msra.mxu0 0
    %198 = vmatprep.subr.bf16.mxu0 0
    %199 = vmatpush1.bf16.msra.mxu0 0
    %200 = vmatprep.subr.bf16.mxu0 0
    %201 = vmatpush1.bf16.msra.mxu0 0
    %202 = vmatprep.subr.bf16.mxu0 0
    %203 = vmatpush1.bf16.msra.mxu0 0
    %204 = vmatprep.subr.bf16.mxu0 0
    %205 = vmatpush1.bf16.msra.mxu0 0
    %206 = vmatprep.subr.bf16.mxu0 0
    %207 = vmatpush1.bf16.msra.mxu0 0
    %208 = vmatprep.subr.bf16.mxu0 0
    %209 = vmatpush1.bf16.msra.mxu0 0
    %210 = vmatprep.subr.bf16.mxu0 0
    %211 = vmatpush1.bf16.msra.mxu0 0
    %212 = vmatprep.mubr.bf16.mxu0 0
    %213 = vmatmul.mubr.bf16.gmra.mrb[0].mxu0 %v110
    %v214 = vpop.f32.mrb[0].mxu0
    %v215 = vadd.f32 %v131, %v214
    %v216 = vpop.f32.mrb[0].mxu0
    %v217 = vpop.f32.mrb[0].mxu0
    %v218 = vpop.f32.mrb[0].mxu0
    %219 = vdwg.mxu0
    %v220 = vmax.f32 %v215, 0.0
    %v221 = vpack.c.bf16 %v220, %v220
    %v222 = vld [vmem:[#allocation5 + $0x50] sm:$0xf]
    %v223 = vld [vmem:[#allocation5 + $0x54] sm:$0xf]
    %v224 = vld [vmem:[#allocation5 + $0x58] sm:$0xf]
    %v225 = vld [vmem:[#allocation5 + $0x5c] sm:$0xf]
    %v226 = vld [vmem:[#allocation5 + $0x60] sm:$0xf]
    %v227 = vld [vmem:[#allocation5 + $0x64] sm:$0xf]
    %v228 = vld [vmem:[#allocation5 + $0x68] sm:$0xf]
    %v229 = vld [vmem:[#allocation5 + $0x6c] sm:$0xf]
    %v230 = vld [vmem:[#allocation5 + $0x70] sm:$0xf]
    %v231 = vld [vmem:[#allocation5 + $0x74] sm:$0xf]
    %v232 = vld [vmem:[#allocation5 + $0x78] sm:$0xf]
    %v233 = vld [vmem:[#allocation5 + $0x7c] sm:$0xf]
    %v234 = vld [vmem:[#allocation5 + $0x80] sm:$0xf]
    %v235 = vld [vmem:[#allocation5 + $0x84] sm:$0xf]
    %v236 = vld [vmem:[#allocation5 + $0x88] sm:$0xf]
    %v237 = vld [vmem:[#allocation5 + $0x8c] sm:$0xf]
    %v238 = vld [vmem:[%s2 + $0x2] sm:$0x1]
    %v239 = vlaneseq
    %v240 = vshrl.u32 %v239, 7
    %v241 = vsub.s32 0, %v240
    %v242 = vrot.slane %v238, %v241
    %v259 = vunpack.c.l.b16 %v222
    %v260 = vunpack.c.l.b16 %v223
    %v261 = vunpack.c.l.b16 %v224
    %v262 = vunpack.c.l.b16 %v225
    %v263 = vunpack.c.l.b16 %v226
    %v264 = vunpack.c.l.b16 %v227
    %v265 = vunpack.c.l.b16 %v228
    %v266 = vunpack.c.l.b16 %v229
    %v267 = vunpack.c.l.b16 %v230
    %v268 = vunpack.c.l.b16 %v231
    %v269 = vunpack.c.l.b16 %v232
    %v270 = vunpack.c.l.b16 %v233
    %v271 = vunpack.c.l.b16 %v234
    %v272 = vunpack.c.l.b16 %v235
    %v273 = vunpack.c.l.b16 %v236
    %v274 = vunpack.c.l.b16 %v237
    %v275 = vpack.c.b16 %v260, %v259
    %v276 = vpack.c.b16 %v262, %v261
    %v277 = vpack.c.b16 %v264, %v263
    %v278 = vpack.c.b16 %v266, %v265
    %v279 = vpack.c.b16 %v268, %v267
    %v280 = vpack.c.b16 %v270, %v269
    %v281 = vpack.c.b16 %v272, %v271
    %v282 = vpack.c.b16 %v274, %v273
    %291 = vmatprep.subr.bf16.mxu0 0
    %292 = vmatpush1.bf16.msra.mxu0 %v275
    %293 = vmatprep.subr.bf16.mxu0 0
    %294 = vmatpush1.bf16.msra.mxu0 %v276
    %295 = vmatprep.subr.bf16.mxu0 0
    %296 = vmatpush1.bf16.msra.mxu0 %v277
    %297 = vmatprep.subr.bf16.mxu0 0
    %298 = vmatpush1.bf16.msra.mxu0 %v278
    %299 = vmatprep.subr.bf16.mxu0 0
    %300 = vmatpush1.bf16.msra.mxu0 %v279
    %301 = vmatprep.subr.bf16.mxu0 0
    %302 = vmatpush1.bf16.msra.mxu0 %v280
    %303 = vmatprep.subr.bf16.mxu0 0
    %304 = vmatpush1.bf16.msra.mxu0 %v281
    %305 = vmatprep.subr.bf16.mxu0 0
    %306 = vmatpush1.bf16.msra.mxu0 %v282
    %307 = vmatprep.subr.bf16.mxu0 0
    %308 = vmatpush1.bf16.msra.mxu0 0
    %309 = vmatprep.subr.bf16.mxu0 0
    %310 = vmatpush1.bf16.msra.mxu0 0
    %311 = vmatprep.subr.bf16.mxu0 0
    %312 = vmatpush1.bf16.msra.mxu0 0
    %313 = vmatprep.subr.bf16.mxu0 0
    %314 = vmatpush1.bf16.msra.mxu0 0
    %315 = vmatprep.subr.bf16.mxu0 0
    %316 = vmatpush1.bf16.msra.mxu0 0
    %317 = vmatprep.subr.bf16.mxu0 0
    %318 = vmatpush1.bf16.msra.mxu0 0
    %319 = vmatprep.subr.bf16.mxu0 0
    %320 = vmatpush1.bf16.msra.mxu0 0
    %321 = vmatprep.subr.bf16.mxu0 0
    %322 = vmatpush1.bf16.msra.mxu0 0
    %323 = vmatprep.mubr.bf16.mxu0 0
    %324 = vmatmul.mubr.bf16.gmra.mrb[0].mxu0 %v221
    %v325 = vpop.f32.mrb[0].mxu0
    %v326 = vadd.f32 %v242, %v325
    %v327 = vpop.f32.mrb[0].mxu0
    %v328 = vpop.f32.mrb[0].mxu0
    %v329 = vpop.f32.mrb[0].mxu0
    %330 = vdwg.mxu0
    %v331 = vmax.f32 %v326, 0.0
    %v332 = vpack.c.bf16 %v331, %v331
    %v333 = vld [vmem:[#allocation5 + $0x90] sm:$0xf]
    %v334 = vld [vmem:[#allocation5 + $0x94] sm:$0xf]
    %v335 = vld [vmem:[#allocation5 + $0x98] sm:$0xf]
    %v336 = vld [vmem:[#allocation5 + $0x9c] sm:$0xf]
    %v337 = vld [vmem:[#allocation5 + $0xa0] sm:$0xf]
    %v338 = vld [vmem:[#allocation5 + $0xa4] sm:$0xf]
    %v339 = vld [vmem:[#allocation5 + $0xa8] sm:$0xf]
    %v340 = vld [vmem:[#allocation5 + $0xac] sm:$0xf]
    %v341 = vld [vmem:[#allocation5 + $0xb0] sm:$0xf]
    %v342 = vld [vmem:[#allocation5 + $0xb4] sm:$0xf]
    %v343 = vld [vmem:[#allocation5 + $0xb8] sm:$0xf]
    %v344 = vld [vmem:[#allocation5 + $0xbc] sm:$0xf]
    %v345 = vld [vmem:[#allocation5 + $0xc0] sm:$0xf]
    %v346 = vld [vmem:[#allocation5 + $0xc4] sm:$0xf]
    %v347 = vld [vmem:[#allocation5 + $0xc8] sm:$0xf]
    %v348 = vld [vmem:[#allocation5 + $0xcc] sm:$0xf]
    %v349 = vld [vmem:[%s2 + $0x3] sm:$0x1]
    %v350 = vlaneseq
    %v351 = vshrl.u32 %v350, 7
    %v352 = vsub.s32 0, %v351
    %v353 = vrot.slane %v349, %v352
    %v370 = vunpack.c.l.b16 %v333
    %v371 = vunpack.c.l.b16 %v334
    %v372 = vunpack.c.l.b16 %v335
    %v373 = vunpack.c.l.b16 %v336
    %v374 = vunpack.c.l.b16 %v337
    %v375 = vunpack.c.l.b16 %v338
    %v376 = vunpack.c.l.b16 %v339
    %v377 = vunpack.c.l.b16 %v340
    %v378 = vunpack.c.l.b16 %v341
    %v379 = vunpack.c.l.b16 %v342
    %v380 = vunpack.c.l.b16 %v343
    %v381 = vunpack.c.l.b16 %v344
    %v382 = vunpack.c.l.b16 %v345
    %v383 = vunpack.c.l.b16 %v346
    %v384 = vunpack.c.l.b16 %v347
    %v385 = vunpack.c.l.b16 %v348
    %v386 = vpack.c.b16 %v371, %v370
    %v387 = vpack.c.b16 %v373, %v372
    %v388 = vpack.c.b16 %v375, %v374
    %v389 = vpack.c.b16 %v377, %v376
    %v390 = vpack.c.b16 %v379, %v378
    %v391 = vpack.c.b16 %v381, %v380
    %v392 = vpack.c.b16 %v383, %v382
    %v393 = vpack.c.b16 %v385, %v384
    %402 = vmatprep.subr.bf16.mxu0 0
    %403 = vmatpush1.bf16.msra.mxu0 %v386
    %404 = vmatprep.subr.bf16.mxu0 0
    %405 = vmatpush1.bf16.msra.mxu0 %v387
    %406 = vmatprep.subr.bf16.mxu0 0
    %407 = vmatpush1.bf16.msra.mxu0 %v388
    %408 = vmatprep.subr.bf16.mxu0 0
    %409 = vmatpush1.bf16.msra.mxu0 %v389
    %410 = vmatprep.subr.bf16.mxu0 0
    %411 = vmatpush1.bf16.msra.mxu0 %v390
    %412 = vmatprep.subr.bf16.mxu0 0
    %413 = vmatpush1.bf16.msra.mxu0 %v391
    %414 = vmatprep.subr.bf16.mxu0 0
    %415 = vmatpush1.bf16.msra.mxu0 %v392
    %416 = vmatprep.subr.bf16.mxu0 0
    %417 = vmatpush1.bf16.msra.mxu0 %v393
    %418 = vmatprep.subr.bf16.mxu0 0
    %419 = vmatpush1.bf16.msra.mxu0 0
    %420 = vmatprep.subr.bf16.mxu0 0
    %421 = vmatpush1.bf16.msra.mxu0 0
    %422 = vmatprep.subr.bf16.mxu0 0
    %423 = vmatpush1.bf16.msra.mxu0 0
    %424 = vmatprep.subr.bf16.mxu0 0
    %425 = vmatpush1.bf16.msra.mxu0 0
    %426 = vmatprep.subr.bf16.mxu0 0
    %427 = vmatpush1.bf16.msra.mxu0 0
    %428 = vmatprep.subr.bf16.mxu0 0
    %429 = vmatpush1.bf16.msra.mxu0 0
    %430 = vmatprep.subr.bf16.mxu0 0
    %431 = vmatpush1.bf16.msra.mxu0 0
    %432 = vmatprep.subr.bf16.mxu0 0
    %433 = vmatpush1.bf16.msra.mxu0 0
    %434 = vmatprep.mubr.bf16.mxu0 0
    %435 = vmatmul.mubr.bf16.gmra.mrb[0].mxu0 %v332
    %v436 = vpop.f32.mrb[0].mxu0
    %v437 = vadd.f32 %v353, %v436
    %v438 = vpop.f32.mrb[0].mxu0
    %v439 = vpop.f32.mrb[0].mxu0
    %v440 = vpop.f32.mrb[0].mxu0
    %441 = vdwg.mxu0
    %v442 = vpack.c.bf16 %v437, %v437
    %443 = vst [vmem:[#allocation7] sm:$0xf] %v442
    // Predicated region
    $region22: #{tpu_custom_call.1} parent=1 // pred_check
      _
    $region23: #{tpu_custom_call.1} parent=1 // pred_check_branch
      %445 = sbr.rel (0) target = $region25
    $region24: #{tpu_custom_call.1} parent=1 // pred_region
      %s447 = ssub.s32 64, 64
      %448 = vsyncadd [#allocation4], %s447
      %s450 = sshll.u32 [#allocation7], 4
      %s451 = int_to_ptr.vmem [resolvable:$true] %s450
      %453 = dma.vmem_to_hbm [thread:$0]  %s451, 64, %s3, [#allocation4]
    $region25: #{tpu_custom_call.1} parent=1 // pred_fallthru
      _
    // Predicated region
    $region26: #{tpu_custom_call.1} parent=1 // pred_check
      _
    $region27: #{tpu_custom_call.1} parent=1 // pred_check_branch
      %455 = sbr.rel (0) target = $region29
    $region28: #{tpu_custom_call.1} parent=1 // pred_region
      %456 = dma.done [#allocation4], 64
    $region29: #{tpu_custom_call.1} parent=1 // pred_fallthru
      _
    %457 = vsyncpa [#allocation3], 1
    %458 = vsyncpa [#allocation6], 1
    %459 = vsyncpa [#allocation4], 1

</llo_original>
